<compile_context>
chip_gen: v6e
topology: v6e:2x2x1
jax: 0.10.0
libtpu: 0.0.40
codegen_flags: <defaults>
</compile_context>

<pallas_src>
from typing import Tuple

import numpy as np
import jax
import jax.numpy as jnp
from jax.experimental import pallas as pl
from jax.experimental.pallas import tpu as pltpu


def _gaussian_kernel1d(ksize: int, sigma: float) -> np.ndarray:
    # Matches kornia.filters.get_gaussian_kernel1d
    x = np.arange(ksize, dtype=np.float64) - ksize // 2
    if ksize % 2 == 0:
        x = x + 0.5
    g = np.exp(-(x ** 2) / (2.0 * sigma ** 2))
    return g / g.sum()


def _pad_src(p: int, n: int, pad: int, mode: str):
    """Source index in [0, n) for padded index p, or None for zero fill."""
    q = p - pad
    if 0 <= q < n:
        return q
    if mode == "reflect":      # reflect_101 (no edge repeat), like F.pad/jnp.pad
        return -q if q < 0 else 2 * (n - 1) - q
    if mode == "replicate":
        return min(max(q, 0), n - 1)
    if mode == "circular":
        return q % n
    return None                # constant -> zeros


def _vmem_capacity_bytes() -> int:
    """Physical VMEM per TensorCore, with a conservative (v7x) fallback."""
    try:
        info = pltpu.get_tpu_info()
        cap = getattr(info, "vmem_capacity_bytes", None)
        if cap:
            return int(cap)
    except Exception:
        pass
    return 64 * 1024 * 1024


def _largest_divisor_leq(n: int, k: int) -> int:
    for d in range(min(n, k), 0, -1):
        if n % d == 0:
            return d
    return 1


def _choose_tb(bc: int, h: int, w: int, hp: int, wp: int, itemsize: int,
               budget_bytes: int):
    """Planes per grid step (TB) and whether BC must be padded to a multiple."""
    # Honest per-plane VMEM accounting:
    #   in + out blocks, double-buffered (input dtype)        4 * H*W*itemsize
    #   H-halo scratch, single-buffered (input dtype)         Hp*W*itemsize
    #   W-halo scratch, single-buffered (f32)                 4 * H*Wp
    #   live f32 accumulators / tap temporaries (~2 planes)   8 * H*W
    per_plane = (4 * h * w * itemsize) + (hp * w * itemsize) + (4 * h * wp) + (8 * h * w)
    max_tb_budget = max(1, budget_bytes // max(per_plane, 1))
    # Keep >= ~4 grid steps when BC allows so the BlockSpec pipeline has
    # something to overlap and the "parallel" axis can shard across v7x's TCs.
    min_steps = min(bc, 4)
    max_tb_steps = max(1, -(-bc // min_steps))
    tb_target = max(1, min(bc, max_tb_budget, max_tb_steps))
    # Prefer an exact divisor of BC (no remainder block); pad BC only when the
    # best divisor would collapse the block size (e.g. prime BC).
    div = _largest_divisor_leq(bc, tb_target)
    if div >= max(1, tb_target // 2):
        return div, False
    return tb_target, True


def make_gaussian_blur2d(kernel_size: Tuple[int, int],
                         sigma: Tuple[float, float],
                         border_type: str = "reflect"):
    """Returns blur(x) for NCHW inputs, matching kornia's gaussian_blur2d."""
    ksize_x, ksize_y = kernel_size
    sigma_x, sigma_y = sigma
    assert ksize_x % 2 == 1 and ksize_y % 2 == 1, "only odd kernel sizes supported"
    assert border_type in ("reflect", "replicate", "circular", "constant")
    kx = [float(v) for v in _gaussian_kernel1d(ksize_x, sigma_x)]
    ky = [float(v) for v in _gaussian_kernel1d(ksize_y, sigma_y)]
    kh, kw = ksize_y, ksize_x
    pad_h, pad_w = (kh - 1) // 2, (kw - 1) // 2
    mode = border_type

    def blur(x: jax.Array) -> jax.Array:
        B, C, H, W = x.shape
        if mode == "reflect":
            assert pad_h < H and pad_w < W, "reflect pad requires pad < dim"
        BC = B * C
        Hp, Wp = H + 2 * pad_h, W + 2 * pad_w
        in_dtype = x.dtype

        vmem_cap = _vmem_capacity_bytes()
        data_budget = int(vmem_cap * 0.45)          # headroom for compiler scratch
        vmem_limit = int(vmem_cap * 3 // 4)

        TB, need_pad = _choose_tb(BC, H, W, Hp, Wp, x.dtype.itemsize, data_budget)

        xf = x.reshape(BC, H, W)
        BCp = BC
        if need_pad:
            BCp = (-(-BC // TB)) * TB
            xf = jnp.pad(xf, ((0, BCp - BC), (0, 0), (0, 0)))

        def blur_kernel(x_ref, o_ref, xh_ref, vw_ref):
            # x_ref/o_ref : (TB, H, W)  input dtype
            # xh_ref      : (TB, Hp, W) input dtype  (H-halo of the input)
            # vw_ref      : (TB, H, Wp) f32          (W-halo of the vertical pass)

            # --- H halo built in VMEM (no HBM pad pass, no plane-sized temp) ---
            xh_ref[:, pad_h:pad_h + H, :] = x_ref[...]
            if pad_h > 0:
                def h_rows(ps):
                    rows = []
                    for p in ps:
                        s = _pad_src(p, H, pad_h, mode)
                        if s is None:
                            rows.append(jnp.zeros((TB, 1, W), in_dtype))
                        else:
                            rows.append(x_ref[:, s:s + 1, :])
                    return jnp.concatenate(rows, axis=1) if len(rows) > 1 else rows[0]
                xh_ref[:, 0:pad_h, :] = h_rows(range(pad_h))
                xh_ref[:, pad_h + H:Hp, :] = h_rows(range(pad_h + H, Hp))

            # --- vertical (sublane-shift) pass: kh taps, f32 accumulate ---
            vert = ky[0] * xh_ref[:, 0:H, :].astype(jnp.float32)
            for i in range(1, kh):
                vert = vert + ky[i] * xh_ref[:, i:i + H, :].astype(jnp.float32)
            vw_ref[:, :, pad_w:pad_w + W] = vert     # vert's lifetime ends here
            del vert

            # --- W halo of the vertical result, sourced from vw_ref interior ---
            if pad_w > 0:
                def w_cols(ps):
                    cols = []
                    for p in ps:
                        s = _pad_src(p, W, pad_w, mode)
                        if s is None:
                            cols.append(jnp.zeros((TB, H, 1), jnp.float32))
                        else:
                            cols.append(vw_ref[:, :, pad_w + s:pad_w + s + 1])
                    return jnp.concatenate(cols, axis=-1) if len(cols) > 1 else cols[0]
                vw_ref[:, :, 0:pad_w] = w_cols(range(pad_w))
                vw_ref[:, :, pad_w + W:Wp] = w_cols(range(pad_w + W, Wp))

            # --- horizontal (lane-shift) pass: kw taps ---
            out = kx[0] * vw_ref[:, :, 0:W]
            for j in range(1, kw):
                out = out + kx[j] * vw_ref[:, :, j:j + W]
            o_ref[...] = out.astype(o_ref.dtype)

        out = pl.pallas_call(
            blur_kernel,
            out_shape=jax.ShapeDtypeStruct((BCp, H, W), x.dtype),
            grid_spec=pltpu.PrefetchScalarGridSpec(
                num_scalar_prefetch=0,
                grid=(BCp // TB,),
                in_specs=[pl.BlockSpec((TB, H, W), lambda b: (b, 0, 0))],
                out_specs=pl.BlockSpec((TB, H, W), lambda b: (b, 0, 0)),
                scratch_shapes=[
                    pltpu.VMEM((TB, Hp, W), in_dtype),
                    pltpu.VMEM((TB, H, Wp), jnp.float32),
                ],
            ),
            compiler_params=pltpu.CompilerParams(
                dimension_semantics=("parallel",),
                vmem_limit_bytes=vmem_limit,
            ),
        )(xf)
        if need_pad:
            out = out[:BC]
        return out.reshape(B, C, H, W)

    return blur


def _reference_blur(x, kernel_size, sigma, border_type="reflect"):
    # Pure-JAX dense 2D reference (same math) for a sanity check.
    ksize_x, ksize_y = kernel_size
    kx = jnp.asarray(_gaussian_kernel1d(ksize_x, sigma[0]), jnp.float32)
    ky = jnp.asarray(_gaussian_kernel1d(ksize_y, sigma[1]), jnp.float32)
    k2d = jnp.outer(ky, kx)
    kh, kw = ksize_y, ksize_x
    ph, pw = (kh - 1) // 2, (kw - 1) // 2
    pad_mode = {"reflect": "reflect", "replicate": "edge",
                "circular": "wrap", "constant": "constant"}[border_type]
    B, C, H, W = x.shape
    xp = jnp.pad(x, ((0, 0), (0, 0), (ph, ph), (pw, pw)), mode=pad_mode)
    out = jnp.zeros(x.shape, jnp.float32)
    for i in range(kh):
        for j in range(kw):
            out = out + k2d[i, j] * xp[:, :, i:i + H, j:j + W].astype(jnp.float32)
    return out.astype(x.dtype)


if __name__ == "__main__":
    key = jax.random.PRNGKey(0)
    B, C, H, W = 2, 4, 16, 16
    x = jax.random.normal(key, (B, C, H, W), dtype=jnp.float32)

    kernel_size = (3, 3)
    sigma = (1.5, 1.5)
    blur = make_gaussian_blur2d(kernel_size, sigma, border_type="reflect")

    y = blur(x)
    y = jax.block_until_ready(y)

    y_ref = _reference_blur(x, kernel_size, sigma, border_type="reflect")
    assert y.shape == (B, C, H, W)
    assert jnp.allclose(y, y_ref, rtol=1e-5, atol=1e-5)

    print("KERNEL_OK")
</pallas_src>

<mosaic_0001>
module attributes {stable_mosaic.version = 11 : i64} {
  func.func @blur_kernel(%arg0: i32, %arg1: memref<2x16x16xf32, #tpu.memory_space<vmem>>, %arg2: memref<2x16x16xf32, #tpu.memory_space<vmem>>, %arg3: memref<2x18x16xf32, #tpu.memory_space<vmem>>, %arg4: memref<2x16x18xf32, #tpu.memory_space<vmem>>) attributes {dimension_semantics = [#tpu.dimension_semantics<parallel>], iteration_bounds = array<i64: 4>, scalar_prefetch = 0 : i64, scratch_operands = 2 : i64, tpu.core_type = #tpu.core_type<tc>, window_params = [{transform_indices = @transform_0, window_bounds = array<i64: 2, 16, 16>}, {transform_indices = @transform_1, window_bounds = array<i64: 2, 16, 16>}]} {
    %c0 = arith.constant 0 : index
    %c0_0 = arith.constant 0 : index
    %c0_1 = arith.constant 0 : index
    %0 = vector.load %arg1[%c0, %c0_0, %c0_1] : memref<2x16x16xf32, #tpu.memory_space<vmem>>, vector<2x16x16xf32>
    %c0_2 = arith.constant 0 : index
    %c1 = arith.constant 1 : index
    %c0_3 = arith.constant 0 : index
    %1 = vector.load %arg3[%c0_2, %c1, %c0_3] : memref<2x18x16xf32, #tpu.memory_space<vmem>>, vector<2x16x16xf32>
    tpu.vector_store %arg3[%c0_2, %c1, %c0_3], %0 {strides = array<i32>} : memref<2x18x16xf32, #tpu.memory_space<vmem>>, vector<2x16x16xf32>,
    %c0_4 = arith.constant 0 : index
    %c1_5 = arith.constant 1 : index
    %c0_6 = arith.constant 0 : index
    %2 = vector.load %arg1[%c0_4, %c1_5, %c0_6] : memref<2x16x16xf32, #tpu.memory_space<vmem>>, vector<2x1x16xf32>
    %c0_7 = arith.constant 0 : index
    %c0_8 = arith.constant 0 : index
    %c0_9 = arith.constant 0 : index
    %3 = vector.load %arg3[%c0_7, %c0_8, %c0_9] : memref<2x18x16xf32, #tpu.memory_space<vmem>>, vector<2x1x16xf32>
    tpu.vector_store %arg3[%c0_7, %c0_8, %c0_9], %2 {strides = array<i32>} : memref<2x18x16xf32, #tpu.memory_space<vmem>>, vector<2x1x16xf32>,
    %c0_10 = arith.constant 0 : index
    %c14 = arith.constant 14 : index
    %c0_11 = arith.constant 0 : index
    %4 = vector.load %arg1[%c0_10, %c14, %c0_11] : memref<2x16x16xf32, #tpu.memory_space<vmem>>, vector<2x1x16xf32>
    %c0_12 = arith.constant 0 : index
    %c17 = arith.constant 17 : index
    %c0_13 = arith.constant 0 : index
    %5 = vector.load %arg3[%c0_12, %c17, %c0_13] : memref<2x18x16xf32, #tpu.memory_space<vmem>>, vector<2x1x16xf32>
    tpu.vector_store %arg3[%c0_12, %c17, %c0_13], %4 {strides = array<i32>} : memref<2x18x16xf32, #tpu.memory_space<vmem>>, vector<2x1x16xf32>,
    %c0_14 = arith.constant 0 : index
    %c0_15 = arith.constant 0 : index
    %c0_16 = arith.constant 0 : index
    %6 = vector.load %arg3[%c0_14, %c0_15, %c0_16] : memref<2x18x16xf32, #tpu.memory_space<vmem>>, vector<2x16x16xf32>
    %cst = arith.constant 0.307801336 : f32
    %7 = vector.broadcast %cst : f32 to vector<2x16x16xf32>
    %8 = arith.mulf %7, %6 : vector<2x16x16xf32>
    %c0_17 = arith.constant 0 : index
    %c1_18 = arith.constant 1 : index
    %c0_19 = arith.constant 0 : index
    %9 = vector.load %arg3[%c0_17, %c1_18, %c0_19] : memref<2x18x16xf32, #tpu.memory_space<vmem>>, vector<2x16x16xf32>
    %cst_20 = arith.constant 0.384397328 : f32
    %10 = vector.broadcast %cst_20 : f32 to vector<2x16x16xf32>
    %11 = arith.mulf %10, %9 : vector<2x16x16xf32>
    %12 = arith.addf %8, %11 : vector<2x16x16xf32>
    %c0_21 = arith.constant 0 : index
    %c2 = arith.constant 2 : index
    %c0_22 = arith.constant 0 : index
    %13 = vector.load %arg3[%c0_21, %c2, %c0_22] : memref<2x18x16xf32, #tpu.memory_space<vmem>>, vector<2x16x16xf32>
    %cst_23 = arith.constant 0.307801336 : f32
    %14 = vector.broadcast %cst_23 : f32 to vector<2x16x16xf32>
    %15 = arith.mulf %14, %13 : vector<2x16x16xf32>
    %16 = arith.addf %12, %15 : vector<2x16x16xf32>
    %c0_24 = arith.constant 0 : index
    %c0_25 = arith.constant 0 : index
    %c1_26 = arith.constant 1 : index
    %17 = vector.load %arg4[%c0_24, %c0_25, %c1_26] : memref<2x16x18xf32, #tpu.memory_space<vmem>>, vector<2x16x16xf32>
    tpu.vector_store %arg4[%c0_24, %c0_25, %c1_26], %16 {strides = array<i32>} : memref<2x16x18xf32, #tpu.memory_space<vmem>>, vector<2x16x16xf32>,
    %c0_27 = arith.constant 0 : index
    %c0_28 = arith.constant 0 : index
    %c2_29 = arith.constant 2 : index
    %18 = vector.load %arg4[%c0_27, %c0_28, %c2_29] : memref<2x16x18xf32, #tpu.memory_space<vmem>>, vector<2x16x1xf32>
    %c0_30 = arith.constant 0 : index
    %c0_31 = arith.constant 0 : index
    %c0_32 = arith.constant 0 : index
    %19 = vector.load %arg4[%c0_30, %c0_31, %c0_32] : memref<2x16x18xf32, #tpu.memory_space<vmem>>, vector<2x16x1xf32>
    tpu.vector_store %arg4[%c0_30, %c0_31, %c0_32], %18 {strides = array<i32>} : memref<2x16x18xf32, #tpu.memory_space<vmem>>, vector<2x16x1xf32>,
    %c0_33 = arith.constant 0 : index
    %c0_34 = arith.constant 0 : index
    %c15 = arith.constant 15 : index
    %20 = vector.load %arg4[%c0_33, %c0_34, %c15] : memref<2x16x18xf32, #tpu.memory_space<vmem>>, vector<2x16x1xf32>
    %c0_35 = arith.constant 0 : index
    %c0_36 = arith.constant 0 : index
    %c17_37 = arith.constant 17 : index
    %21 = vector.load %arg4[%c0_35, %c0_36, %c17_37] : memref<2x16x18xf32, #tpu.memory_space<vmem>>, vector<2x16x1xf32>
    tpu.vector_store %arg4[%c0_35, %c0_36, %c17_37], %20 {strides = array<i32>} : memref<2x16x18xf32, #tpu.memory_space<vmem>>, vector<2x16x1xf32>,
    %c0_38 = arith.constant 0 : index
    %c0_39 = arith.constant 0 : index
    %c0_40 = arith.constant 0 : index
    %22 = vector.load %arg4[%c0_38, %c0_39, %c0_40] : memref<2x16x18xf32, #tpu.memory_space<vmem>>, vector<2x16x16xf32>
    %cst_41 = arith.constant 0.307801336 : f32
    %23 = vector.broadcast %cst_41 : f32 to vector<2x16x16xf32>
    %24 = arith.mulf %23, %22 : vector<2x16x16xf32>
    %c0_42 = arith.constant 0 : index
    %c0_43 = arith.constant 0 : index
    %c1_44 = arith.constant 1 : index
    %25 = vector.load %arg4[%c0_42, %c0_43, %c1_44] : memref<2x16x18xf32, #tpu.memory_space<vmem>>, vector<2x16x16xf32>
    %cst_45 = arith.constant 0.384397328 : f32
    %26 = vector.broadcast %cst_45 : f32 to vector<2x16x16xf32>
    %27 = arith.mulf %26, %25 : vector<2x16x16xf32>
    %28 = arith.addf %24, %27 : vector<2x16x16xf32>
    %c0_46 = arith.constant 0 : index
    %c0_47 = arith.constant 0 : index
    %c2_48 = arith.constant 2 : index
    %29 = vector.load %arg4[%c0_46, %c0_47, %c2_48] : memref<2x16x18xf32, #tpu.memory_space<vmem>>, vector<2x16x16xf32>
    %cst_49 = arith.constant 0.307801336 : f32
    %30 = vector.broadcast %cst_49 : f32 to vector<2x16x16xf32>
    %31 = arith.mulf %30, %29 : vector<2x16x16xf32>
    %32 = arith.addf %28, %31 : vector<2x16x16xf32>
    %c0_50 = arith.constant 0 : index
    %c0_51 = arith.constant 0 : index
    %c0_52 = arith.constant 0 : index
    %33 = vector.load %arg2[%c0_50, %c0_51, %c0_52] : memref<2x16x16xf32, #tpu.memory_space<vmem>>, vector<2x16x16xf32>
    tpu.vector_store %arg2[%c0_50, %c0_51, %c0_52], %32 {strides = array<i32>} : memref<2x16x16xf32, #tpu.memory_space<vmem>>, vector<2x16x16xf32>,
    return
  }
  func.func @transform_0(%arg0: i32) -> (i32, i32, i32) {
    %c0_i32 = arith.constant 0 : i32
    %c0_i32_0 = arith.constant 0 : i32
    %c0_i32_1 = arith.constant 0 : i32
    return %arg0, %c0_i32, %c0_i32_0 : i32, i32, i32
  }
  func.func @transform_1(%arg0: i32) -> (i32, i32, i32) {
    %c0_i32 = arith.constant 0 : i32
    %c0_i32_0 = arith.constant 0 : i32
    %c0_i32_1 = arith.constant 0 : i32
    return %arg0, %c0_i32, %c0_i32_0 : i32, i32, i32
  }
}

</mosaic_0001>

<llo_original>
// kernel: tpu_custom_call.1
$region0: #{tpu_custom_call.1}
  #allocation0 [shape = 'u32[]', space=smem, size = 0x4, offset = 0x4, fixed_abs, tag = 'smem constant byte address 0x4 - core index']
  #allocation1 [shape = 'u32[144,128]{1,0:T(1,128)}', space=vmem, size = 0x12000, scoped, tag = 'internal scratch']
  #allocation2 [shape = 'f32[2,18,16]{2,1,0:T(8,128)}', space=vmem, size = 0x6000, scoped, tag = 'scratch operand']
  #allocation3 [shape = 'f32[2,16,18]{2,1,0:T(8,128)}', space=vmem, size = 0x4000, scoped, tag = 'scratch operand']
  %s0 = inlined_call_operand.hbm [shape: f32[8,16,16], index: 0, kind: input, shape index: {}]
  %s1 = inlined_call_operand.hbm [shape: f32[8,16,16], index: 1, kind: output, shape index: {}]
  %s2 = sld [smem:[#allocation0]]
  $region41: #{tpu_custom_call.1} parent=0
    _
  %s4 = ssub.s32 1, %s2
  %s5 = scalar_select 0, %s4, %s2
  $region1: #{tpu_custom_call.1} parent=0
    #allocation4 [shape = 'u8[32768]{0}', space=vmem, size = 0x8000, scoped, tag = 'input window, operand 0']
    #allocation5 [shape = 's32[2]{0}', space=sflag, size = 0x8, scoped, tag = 'scoped memory for tpu_custom_call.1']
    #allocation6 [shape = 's32[2]{0}', space=sflag, size = 0x8, scoped, tag = 'scoped memory for tpu_custom_call.1']
    #allocation7 [shape = 'u8[32768]{0}', space=vmem, size = 0x8000, scoped, tag = 'output window, operand 0']
    %6 = vsyncpa [#allocation5], 0
    %s7 = scalar_lea.sflag [#allocation5], 1
    %8 = vsyncpa %s7, 0
    %9 = vsyncpa [#allocation6], 0
    %s10 = scalar_lea.sflag [#allocation6], 1
    %11 = vsyncpa %s10, 0
    loop: start=0, step=1, limit=6
    $region2: #{tpu_custom_call.1} parent=1 // loop_pre_header
      _
    $region3: #{tpu_custom_call.1} parent=1 // loop_header
      %s13 = sphi 0, %s17
      %p14 = scmp.ge.s32.totalorder %s13, 6
      %s23 = sphi 0, %s25
      %s26 = sphi 0, %s23
      %s27 = sphi 0, %s26
      %s43 = sphi 0, %s27
      %s49 = sphi 0, %s51
      %s52 = sphi 0, %s49
      %s53 = sphi 0, %s52
      %s69 = sphi 0, %s53
    $region4: #{tpu_custom_call.1} parent=1 // loop_header_branch
      %16 = sbr.rel (%p14) target = $region8
    $region5: #{tpu_custom_call.1} parent=1 // loop_body
      %s18 = ssub.s32 %s13, 1
      %s19 = ssub.s32 %s13, 2
      %s20 = sadd.s32 %s13, 1
      %s21 = ssub.s32 %s13, %s20
      %p22 = scmp.eq.s32.totalorder %s21, 0
      %s24 = sadd.s32 %s23, 1
      %s25 = scalar_select %p22, %s23, %s24
      %p28 = pneg %p22
      %p29 = scmp.eq.s32.totalorder %s13, 3
      %p30 = por %p28, %p29
      %p31 = scmp.ne.s32.totalorder %s23, %s26
      %p32 = scmp.eq.s32.totalorder %s13, 0
      %p33 = por %p31, %p32
      %p34 = scmp.ne.s32.totalorder %s23, %s26
      %p35 = scmp.eq.s32.totalorder %s18, 3
      %p36 = por %p34, %p35
      %p37 = scmp.ne.s32.totalorder %s26, %s27
      %p38 = scmp.eq.s32.totalorder %s18, 0
      %p39 = por %p37, %p38
      %p40 = scmp.ne.s32.totalorder %s26, %s27
      %p41 = scmp.eq.s32.totalorder %s19, 3
      %p42 = por %p40, %p41
      %p44 = scmp.ne.s32.totalorder %s27, %s43
      %p45 = scmp.eq.s32.totalorder %s19, 0
      %p46 = por %p44, %p45
      %s47 = ssub.s32 %s13, %s20
      %p48 = scmp.eq.s32.totalorder %s47, 0
      %s50 = sadd.s32 %s49, 1
      %s51 = scalar_select %p48, %s49, %s50
      %p54 = pneg %p48
      %p55 = scmp.eq.s32.totalorder %s13, 3
      %p56 = por %p54, %p55
      %p57 = scmp.ne.s32.totalorder %s49, %s52
      %p58 = scmp.eq.s32.totalorder %s13, 0
      %p59 = por %p57, %p58
      %p60 = scmp.ne.s32.totalorder %s49, %s52
      %p61 = scmp.eq.s32.totalorder %s18, 3
      %p62 = por %p60, %p61
      %p63 = scmp.ne.s32.totalorder %s52, %s53
      %p64 = scmp.eq.s32.totalorder %s18, 0
      %p65 = por %p63, %p64
      %p66 = scmp.ne.s32.totalorder %s52, %s53
      %p67 = scmp.eq.s32.totalorder %s19, 3
      %p68 = por %p66, %p67
      %p70 = scmp.ne.s32.totalorder %s53, %s69
      %p71 = scmp.eq.s32.totalorder %s19, 0
      %p72 = por %p70, %p71
      %p73 = scmp.le.s32.totalorder 1, %s13
      %p74 = scmp.lt.s32.totalorder %s13, 5
      %p75 = pnand %p73, %p74
      %p76 = pneg %p75
      // Predicated region
      $region9: #{tpu_custom_call.1} parent=5 // pred_check
        _
      $region10: #{tpu_custom_call.1} parent=5 // pred_check_branch
        %78 = sbr.rel (%p75) target = $region12
      $region11: #{tpu_custom_call.1} parent=5 // pred_region
        %s79 = ssub.s32 %s13, 1
      $region12: #{tpu_custom_call.1} parent=5 // pred_fallthru
        _
      %p80 = scmp.lt.s32.totalorder %s13, 4
      // Predicated region
      $region13: #{tpu_custom_call.1} parent=5 // pred_check
        %p81 = pneg %p80
      $region14: #{tpu_custom_call.1} parent=5 // pred_check_branch
        %83 = sbr.rel (%p81) target = $region16
      $region15: #{tpu_custom_call.1} parent=5 // pred_region
        // Predicated region
        $region17: #{tpu_custom_call.1} parent=15 // pred_check
          %p84 = pneg %p33
        $region18: #{tpu_custom_call.1} parent=15 // pred_check_branch
          %86 = sbr.rel (%p84) target = $region20
        $region19: #{tpu_custom_call.1} parent=15 // pred_region
          %s87 = sand.u32 %s23, 1
          %s88 = scalar_lea.sflag [#allocation5], %s87
          %s89 = sand.u32 %s23, 1
          %s90 = smul.addr %s89, 32
          %s91 = scalar_lea.vmem [#allocation4], %s90
          %s92 = smul.u32 2, %s13
          %s94 = ssub.s32 512, 512
          %95 = vsyncadd %s88, %s94
          %s96 = smul.addr %s92, 2
          %s97 = smul.addr %s96, 128
          %s98 = scalar_lea.hbm %s0, %s97
          %s99 = sshll.u32 %s91, 4
          %s100 = int_to_ptr.vmem [resolvable:$true] %s99
          %105 = dma.hbm_to_vmem [thread:$0]  %s98, 512, %s100, %s88, 128, 128, 8
        $region20: #{tpu_custom_call.1} parent=15 // pred_fallthru
          _
      $region16: #{tpu_custom_call.1} parent=5 // pred_fallthru
        _
      %p106 = scmp.le.s32.totalorder 1, %s13
      %p107 = scmp.lt.s32.totalorder %s13, 5
      %p108 = pnand %p106, %p107
      %p109 = pneg %p108
      // Predicated region
      $region21: #{tpu_custom_call.1} parent=5 // pred_check
        _
      $region22: #{tpu_custom_call.1} parent=5 // pred_check_branch
        %111 = sbr.rel (%p108) target = $region24
      $region23: #{tpu_custom_call.1} parent=5 // pred_region
        %s112 = ssub.s32 %s13, 1
        %s113 = sand.u32 %s26, 1
        %s114 = scalar_lea.sflag [#allocation5], %s113
        %s115 = sand.u32 %s26, 1
        %s116 = smul.addr %s115, 32
        %s117 = scalar_lea.vmem [#allocation4], %s116
        // Predicated region
        $region25: #{tpu_custom_call.1} parent=23 // pred_check
          %p118 = pneg %p39
        $region26: #{tpu_custom_call.1} parent=23 // pred_check_branch
          %120 = sbr.rel (%p118) target = $region28
        $region27: #{tpu_custom_call.1} parent=23 // pred_region
          %121 = dma.done %s114, 512
        $region28: #{tpu_custom_call.1} parent=23 // pred_fallthru
          _
        %s122 = sand.u32 %s26, 1
        %s123 = scalar_lea.sflag [#allocation5], %s122
        %s124 = sand.u32 %s26, 1
        %s125 = smul.addr %s124, 32
        %s126 = scalar_lea.vmem [#allocation4], %s125
        %p127 = pneg %p39
        %p128 = pneg %p36
        %p129 = pneg %p65
        %p130 = pneg %p62
        %s131 = sand.u32 %s52, 1
        %s132 = scalar_lea.sflag [#allocation6], %s131
        %s133 = sand.u32 %s52, 1
        %s134 = smul.addr %s133, 32
        %s135 = scalar_lea.vmem [#allocation7], %s134
        %s136 = smul.u32 2, %s18
        %s137 = smul.u32 2, %s18
        %v138 = vld [vmem:[%s117] sm:$0xff]
        %v139 = vld [vmem:[%s117 + $0x8] sm:$0xff]
        %v140 = vld [vmem:[%s117 + $0x10] sm:$0xff]
        %v141 = vld [vmem:[%s117 + $0x18] sm:$0xff]
        %vm142 = vcmask 130048
        %143 = vst.msk [vmem:[#allocation2 + $0x1] sm:$0xff] %vm142, %v138
        %144 = vst.msk [vmem:[#allocation2 + $0x9] sm:$0xff] %vm142, %v139
        %145 = vst.msk [vmem:[#allocation2 + $0x19] sm:$0xff] %vm142, %v140
        %146 = vst.msk [vmem:[#allocation2 + $0x21] sm:$0xff] %vm142, %v141
        %v147 = vld [vmem:[%s117 + $0x1] sm:$0x1]
        %v148 = vld [vmem:[%s117 + $0x11] sm:$0x1]
        %vm149 = vcmask 122880
        %150 = vst.msk [vmem:[#allocation2] sm:$0x1] %vm149, %v147
        %151 = vst.msk [vmem:[#allocation2 + $0x18] sm:$0x1] %vm149, %v148
        %v152 = vld [vmem:[%s117 + $0xe] sm:$0x1]
        %v153 = vld [vmem:[%s117 + $0x1e] sm:$0x1]
        %154 = vst.msk [vmem:[#allocation2 + $0x11] sm:$0x1] %vm149, %v152
        %155 = vst.msk [vmem:[#allocation2 + $0x29] sm:$0x1] %vm149, %v153
        %v156 = vld [vmem:[#allocation2] sm:$0xff]
        %v157 = vld [vmem:[#allocation2 + $0x8] sm:$0xff]
        %v158 = vld [vmem:[#allocation2 + $0x18] sm:$0xff]
        %v159 = vld [vmem:[#allocation2 + $0x20] sm:$0xff]
        %v160 = vmul.f32 %v156, 0.30780134
        %v161 = vmul.f32 %v157, 0.30780134
        %v162 = vmul.f32 %v158, 0.30780134
        %v163 = vmul.f32 %v159, 0.30780134
        %v164 = vld [vmem:[#allocation2 + $0x1] sm:$0xff]
        %v165 = vld [vmem:[#allocation2 + $0x9] sm:$0xff]
        %v166 = vld [vmem:[#allocation2 + $0x19] sm:$0xff]
        %v167 = vld [vmem:[#allocation2 + $0x21] sm:$0xff]
        %v168 = vmul.f32 %v164, 0.38439733
        %v169 = vmul.f32 %v165, 0.38439733
        %v170 = vmul.f32 %v166, 0.38439733
        %v171 = vmul.f32 %v167, 0.38439733
        %v172 = vadd.f32 %v160, %v168
        %v173 = vadd.f32 %v161, %v169
        %v174 = vadd.f32 %v162, %v170
        %v175 = vadd.f32 %v163, %v171
        %v176 = vld [vmem:[#allocation2 + $0x2] sm:$0xff]
        %v177 = vld [vmem:[#allocation2 + $0xa] sm:$0xff]
        %v178 = vld [vmem:[#allocation2 + $0x1a] sm:$0xff]
        %v179 = vld [vmem:[#allocation2 + $0x22] sm:$0xff]
        %v180 = vmul.f32 %v176, 0.30780134
        %v181 = vmul.f32 %v177, 0.30780134
        %v182 = vmul.f32 %v178, 0.30780134
        %v183 = vmul.f32 %v179, 0.30780134
        %v184 = vadd.f32 %v172, %v180
        %v185 = vadd.f32 %v173, %v181
        %v186 = vadd.f32 %v174, %v182
        %v187 = vadd.f32 %v175, %v183
        %192 = vrot.lane.b32.xlu0 %v184, 1
        %v193 = vpop.permute.xlu0 %192
        %194 = vrot.lane.b32.xlu0 %v185, 1
        %v195 = vpop.permute.xlu0 %194
        %196 = vrot.lane.b32.xlu0 %v186, 1
        %v197 = vpop.permute.xlu0 %196
        %198 = vrot.lane.b32.xlu0 %v187, 1
        %v199 = vpop.permute.xlu0 %198
        %vm204 = vcmask 138248
        %205 = vst.msk [vmem:[#allocation3] sm:$0xff] %vm204, %v193
        %206 = vst.msk [vmem:[#allocation3 + $0x8] sm:$0xff] %vm204, %v195
        %207 = vst.msk [vmem:[#allocation3 + $0x10] sm:$0xff] %vm204, %v197
        %208 = vst.msk [vmem:[#allocation3 + $0x18] sm:$0xff] %vm204, %v199
        %v209 = vld [vmem:[#allocation3] sm:$0xff]
        %v210 = vld [vmem:[#allocation3 + $0x8] sm:$0xff]
        %v211 = vld [vmem:[#allocation3 + $0x10] sm:$0xff]
        %v212 = vld [vmem:[#allocation3 + $0x18] sm:$0xff]
        %217 = vrot.lane.b32.xlu0 %v209, 126
        %v218 = vpop.permute.xlu0 %217
        %219 = vrot.lane.b32.xlu0 %v210, 126
        %v220 = vpop.permute.xlu0 %219
        %221 = vrot.lane.b32.xlu0 %v211, 126
        %v222 = vpop.permute.xlu0 %221
        %223 = vrot.lane.b32.xlu0 %v212, 126
        %v224 = vpop.permute.xlu0 %223
        %vm229 = vcmask 7168
        %230 = vst.msk [vmem:[#allocation3] sm:$0xff] %vm229, %v218
        %231 = vst.msk [vmem:[#allocation3 + $0x8] sm:$0xff] %vm229, %v220
        %232 = vst.msk [vmem:[#allocation3 + $0x10] sm:$0xff] %vm229, %v222
        %233 = vst.msk [vmem:[#allocation3 + $0x18] sm:$0xff] %vm229, %v224
        %v234 = vld [vmem:[#allocation3] sm:$0xff]
        %v235 = vld [vmem:[#allocation3 + $0x8] sm:$0xff]
        %v236 = vld [vmem:[#allocation3 + $0x10] sm:$0xff]
        %v237 = vld [vmem:[#allocation3 + $0x18] sm:$0xff]
        %242 = vrot.lane.b32.xlu0 %v234, 2
        %v243 = vpop.permute.xlu0 %242
        %244 = vrot.lane.b32.xlu0 %v235, 2
        %v245 = vpop.permute.xlu0 %244
        %246 = vrot.lane.b32.xlu0 %v236, 2
        %v247 = vpop.permute.xlu0 %246
        %248 = vrot.lane.b32.xlu0 %v237, 2
        %v249 = vpop.permute.xlu0 %248
        %vm254 = vcmask 146568
        %255 = vst.msk [vmem:[#allocation3] sm:$0xff] %vm254, %v243
        %256 = vst.msk [vmem:[#allocation3 + $0x8] sm:$0xff] %vm254, %v245
        %257 = vst.msk [vmem:[#allocation3 + $0x10] sm:$0xff] %vm254, %v247
        %258 = vst.msk [vmem:[#allocation3 + $0x18] sm:$0xff] %vm254, %v249
        %v259 = vld [vmem:[#allocation3] sm:$0xff]
        %v260 = vld [vmem:[#allocation3 + $0x8] sm:$0xff]
        %v261 = vld [vmem:[#allocation3 + $0x10] sm:$0xff]
        %v262 = vld [vmem:[#allocation3 + $0x18] sm:$0xff]
        %v263 = vmul.f32 %v259, 0.30780134
        %v264 = vmul.f32 %v260, 0.30780134
        %v265 = vmul.f32 %v261, 0.30780134
        %v266 = vmul.f32 %v262, 0.30780134
        %v267 = vmul.f32 %v259, 0.38439733
        %v268 = vmul.f32 %v260, 0.38439733
        %v269 = vmul.f32 %v261, 0.38439733
        %v270 = vmul.f32 %v262, 0.38439733
        %275 = vrot.lane.b32.xlu0 %v267, 127
        %v276 = vpop.permute.xlu0 %275
        %277 = vrot.lane.b32.xlu0 %v268, 127
        %v278 = vpop.permute.xlu0 %277
        %279 = vrot.lane.b32.xlu0 %v269, 127
        %v280 = vpop.permute.xlu0 %279
        %281 = vrot.lane.b32.xlu0 %v270, 127
        %v282 = vpop.permute.xlu0 %281
        %v287 = vadd.f32 %v263, %v276
        %v288 = vadd.f32 %v264, %v278
        %v289 = vadd.f32 %v265, %v280
        %v290 = vadd.f32 %v266, %v282
        %295 = vrot.lane.b32.xlu0 %v263, 126
        %v296 = vpop.permute.xlu0 %295
        %297 = vrot.lane.b32.xlu0 %v264, 126
        %v298 = vpop.permute.xlu0 %297
        %299 = vrot.lane.b32.xlu0 %v265, 126
        %v300 = vpop.permute.xlu0 %299
        %301 = vrot.lane.b32.xlu0 %v266, 126
        %v302 = vpop.permute.xlu0 %301
        %v307 = vadd.f32 %v287, %v296
        %v308 = vadd.f32 %v288, %v298
        %v309 = vadd.f32 %v289, %v300
        %v310 = vadd.f32 %v290, %v302
        %311 = vst.msk [vmem:[%s135] sm:$0xff] %vm142, %v307
        %312 = vst.msk [vmem:[%s135 + $0x8] sm:$0xff] %vm142, %v308
        %313 = vst.msk [vmem:[%s135 + $0x10] sm:$0xff] %vm142, %v309
        %314 = vst.msk [vmem:[%s135 + $0x18] sm:$0xff] %vm142, %v310
        %s315 = sand.u32 %s52, 1
        %s316 = scalar_lea.sflag [#allocation6], %s315
        %s317 = sand.u32 %s52, 1
        %s318 = smul.addr %s317, 32
        %s319 = scalar_lea.vmem [#allocation7], %s318
        // Predicated region
        $region29: #{tpu_custom_call.1} parent=23 // pred_check
          %p320 = pneg %p62
        $region30: #{tpu_custom_call.1} parent=23 // pred_check_branch
          %322 = sbr.rel (%p320) target = $region32
        $region31: #{tpu_custom_call.1} parent=23 // pred_region
          %s323 = smul.u32 2, %s18
          %s325 = ssub.s32 512, 512
          %326 = vsyncadd %s316, %s325
          %s327 = smul.addr %s323, 2
          %s328 = smul.addr %s327, 128
          %s329 = scalar_lea.hbm %s1, %s328
          %s330 = sshll.u32 %s319, 4
          %s331 = int_to_ptr.vmem [resolvable:$true] %s330
          %336 = dma.vmem_to_hbm [thread:$0]  %s331, 512, %s329, %s316, 128, 128, 8
        $region32: #{tpu_custom_call.1} parent=23 // pred_fallthru
          _
      $region24: #{tpu_custom_call.1} parent=5 // pred_fallthru
        _
      %p337 = scmp.le.s32.totalorder 2, %s13
      // Predicated region
      $region33: #{tpu_custom_call.1} parent=5 // pred_check
        %p338 = pneg %p337
      $region34: #{tpu_custom_call.1} parent=5 // pred_check_branch
        %340 = sbr.rel (%p338) target = $region36
      $region35: #{tpu_custom_call.1} parent=5 // pred_region
        %s341 = ssub.s32 %s13, 2
        // Predicated region
        $region37: #{tpu_custom_call.1} parent=35 // pred_check
          %p342 = pneg %p68
        $region38: #{tpu_custom_call.1} parent=35 // pred_check_branch
          %344 = sbr.rel (%p342) target = $region40
        $region39: #{tpu_custom_call.1} parent=35 // pred_region
          %s345 = sand.u32 %s53, 1
          %s346 = scalar_lea.sflag [#allocation6], %s345
          %s347 = sand.u32 %s53, 1
          %s348 = smul.addr %s347, 32
          %s349 = scalar_lea.vmem [#allocation7], %s348
          %350 = dma.done %s346, 512
        $region40: #{tpu_custom_call.1} parent=35 // pred_fallthru
          _
      $region36: #{tpu_custom_call.1} parent=5 // pred_fallthru
        _
    $region6: #{tpu_custom_call.1} parent=1 // loop_footer
      %s17 = sadd.s32 1, %s13
    $region7: #{tpu_custom_call.1} parent=1 // loop_footer_branch
      %12 = sbr.rel target = $region3
    $region8: #{tpu_custom_call.1} parent=1 // loop_exit
      _
    %351 = vsyncpa [#allocation5], 1
    %s352 = scalar_lea.sflag [#allocation5], 1
    %353 = vsyncpa %s352, 1
    %354 = vsyncpa [#allocation6], 1
    %s355 = scalar_lea.sflag [#allocation6], 1
    %356 = vsyncpa %s355, 1

</llo_original>
